<compile_context>
chip_gen: v5e
topology: v5e:2x2
jax: 0.10.0
libtpu: 0.0.40
codegen_flags: <defaults>
</compile_context>

<pallas_src>
import jax
import jax.numpy as jnp
from jax.experimental import pallas as pl
from jax.experimental.pallas import tpu as pltpu

_LANE_CANDIDATES = (512, 256, 128)       # lane-dense last dims (multiples of 128)


def _biased_liner_kernel(bias_ref, x_ref, o_ref):
    # bias_ref: (1, 1) f32 in SMEM; x_ref / o_ref: VMEM tiles.
    b = bias_ref[0, 0].astype(o_ref.dtype)
    o_ref[...] = x_ref[...].astype(o_ref.dtype) + b


def _tpu_generation() -> int:
    """Best-effort TPU generation from the device kind string (0 if unknown)."""
    try:
        kind = jax.devices()[0].device_kind.lower()
    except Exception:  # pragma: no cover - defensive
        return 0
    if "7" in kind:
        return 7
    if "v6" in kind or "6e" in kind:
        return 6
    if "v5" in kind:
        return 5
    if "v4" in kind:
        return 4
    return 0


def biased_liner(x: jax.Array, bias) -> jax.Array:
    """Computes x + bias (scalar), matching BiasedLiner.forward."""
    orig_shape = x.shape
    in_dtype = x.dtype
    n = int(x.size)

    # PyTorch promotion with a 0-dim f32 Parameter: floating x keeps x.dtype,
    # integer x promotes to float32.
    out_dtype = in_dtype if jnp.issubdtype(in_dtype, jnp.floating) else jnp.float32

    if n == 0:
        return jnp.zeros(orig_shape, out_dtype)

    in_size = jnp.dtype(in_dtype).itemsize
    out_size = jnp.dtype(out_dtype).itemsize

    # --- lane-dense view without padding whenever possible -------------------
    flat = x.reshape(-1)                                   # free for contiguous x
    lanes = next((l for l in _LANE_CANDIDATES if n % l == 0), None)
    ragged = lanes is None
    if ragged:
        # Rare: n not a multiple of 128.  Minimal pad + slice fallback.
        # TODO(synk): replace with an in-kernel masked tail store to avoid the
        # extra HBM passes for non-128-aligned element counts.
        lanes = 128
        rows = -(-n // lanes)
        flat = jnp.pad(flat, (0, rows * lanes - n))
    else:
        rows = n // lanes
    x2d = flat.reshape(rows, lanes)

    # --- static tile geometry (all Python ints) ------------------------------
    gen = _tpu_generation()
    target_tile_bytes = (4 if gen >= 6 else 2) * 1024 * 1024

    # dtype-aware sublane packing: 8 for 32-bit, 16 for 16-bit, 32 for 8-bit.
    pack = max(1, 4 // min(in_size, out_size))
    sublanes = 8 * pack

    row_bytes = lanes * max(in_size, out_size)
    tile_r_cap = max(sublanes, (target_tile_bytes // row_bytes) // sublanes * sublanes)
    tile_r = min(tile_r_cap, -(-rows // sublanes) * sublanes)
    if tile_r > rows:
        tile_r = rows                      # tiny input: single full-extent block
    grid = (pl.cdiv(rows, tile_r),)        # last block may be partial (masked)

    # v7x has 2 TensorCores: shard grid steps across them when there is work.
    if gen >= 7 and grid[0] >= 2:
        dim_sem = (pltpu.CORE_PARALLEL,)
    else:
        dim_sem = ("parallel",)

    bias_smem = jnp.asarray(bias, dtype=jnp.float32).reshape(1, 1)

    out2d = pl.pallas_call(
        _biased_liner_kernel,
        out_shape=jax.ShapeDtypeStruct((rows, lanes), out_dtype),
        grid=grid,
        in_specs=[
            pl.BlockSpec(memory_space=pltpu.SMEM),             # scalar bias
            pl.BlockSpec((tile_r, lanes), lambda i: (i, 0)),   # tiled input
        ],
        out_specs=pl.BlockSpec((tile_r, lanes), lambda i: (i, 0)),
        compiler_params=pltpu.CompilerParams(dimension_semantics=dim_sem),
        cost_estimate=pl.CostEstimate(
            flops=rows * lanes,
            transcendentals=0,
            bytes_accessed=rows * lanes * (in_size + out_size),
        ),
    )(bias_smem, x2d)

    out = out2d.reshape(-1)
    if ragged:
        out = out[:n]
    return out.reshape(orig_shape)


class BiasedLinerPallas:
    """Mirror of the PyTorch module; parameter initialized deterministically."""

    def __init__(self, offset: float = 20.0):
        self.bias = jnp.float32(offset)  # nn.Parameter(torch.tensor(offset))

    def __call__(self, x: jax.Array) -> jax.Array:
        return biased_liner(x, self.bias)


if __name__ == "__main__":
    key = jax.random.PRNGKey(0)
    # NCHW input, small shapes: batch=2, channels=4, spatial=16x16.
    x = jax.random.normal(key, (2, 4, 16, 16), dtype=jnp.float32)

    module = BiasedLinerPallas(offset=20.0)
    out = module(x)
    out = jax.block_until_ready(out)

    # Correctness check vs. plain JAX reference.
    ref = x + module.bias
    assert out.shape == x.shape
    assert out.dtype == x.dtype
    assert jnp.allclose(out, ref, atol=1e-6, rtol=1e-6)

    print("KERNEL_OK")
</pallas_src>

<mosaic_0001>
module attributes {stable_mosaic.version = 11 : i64} {
  func.func @_biased_liner_kernel(%arg0: i32, %arg1: memref<1x1xf32, #tpu.memory_space<smem>>, %arg2: memref<4x512xf32, #tpu.memory_space<vmem>>, %arg3: memref<4x512xf32, #tpu.memory_space<vmem>>) attributes {dimension_semantics = [#tpu.dimension_semantics<parallel>], iteration_bounds = array<i64: 1>, scalar_prefetch = 0 : i64, scratch_operands = 0 : i64, tpu.core_type = #tpu.core_type<tc>, window_params = [{transform_indices = @transform_0, window_bounds = array<i64: 1, 1>}, {transform_indices = @transform_1, window_bounds = array<i64: 4, 512>}, {transform_indices = @transform_2, window_bounds = array<i64: 4, 512>}]} {
    %c0 = arith.constant 0 : index
    %c0_0 = arith.constant 0 : index
    %0 = memref.load %arg1[%c0, %c0_0] : memref<1x1xf32, #tpu.memory_space<smem>>
    %c0_1 = arith.constant 0 : index
    %c0_2 = arith.constant 0 : index
    %1 = vector.load %arg2[%c0_1, %c0_2] : memref<4x512xf32, #tpu.memory_space<vmem>>, vector<4x512xf32>
    %2 = vector.broadcast %0 : f32 to vector<4x512xf32>
    %3 = arith.addf %1, %2 : vector<4x512xf32>
    %c0_3 = arith.constant 0 : index
    %c0_4 = arith.constant 0 : index
    %4 = vector.load %arg3[%c0_3, %c0_4] : memref<4x512xf32, #tpu.memory_space<vmem>>, vector<4x512xf32>
    tpu.vector_store %arg3[%c0_3, %c0_4], %3 {strides = array<i32>} : memref<4x512xf32, #tpu.memory_space<vmem>>, vector<4x512xf32>,
    return
  }
  func.func @transform_0(%arg0: i32) -> (i32, i32) {
    %c0_i32 = arith.constant 0 : i32
    %c0_i32_0 = arith.constant 0 : i32
    %c0_i32_1 = arith.constant 0 : i32
    return %c0_i32, %c0_i32_0 : i32, i32
  }
  func.func @transform_1(%arg0: i32) -> (i32, i32) {
    %c0_i32 = arith.constant 0 : i32
    %c0_i32_0 = arith.constant 0 : i32
    return %arg0, %c0_i32 : i32, i32
  }
  func.func @transform_2(%arg0: i32) -> (i32, i32) {
    %c0_i32 = arith.constant 0 : i32
    %c0_i32_0 = arith.constant 0 : i32
    return %arg0, %c0_i32 : i32, i32
  }
}

</mosaic_0001>

<llo_original>
// kernel: tpu_custom_call.1
$region0: #{tpu_custom_call.1}
  #allocation0 [shape = 'u32[]', space=smem, size = 0x4, offset = 0x4, fixed_abs, tag = 'smem constant byte address 0x4 - core index']
  #allocation1 [shape = 'u32[72,128]{1,0:T(1,128)}', space=vmem, size = 0x9000, scoped, tag = 'internal scratch']
  #allocation2 [shape = 'f32[1,1]{1,0:T(1,128)S(6)}', space=smem, size = 0x200, scoped, tag = 'scoped memory for tpu_custom_call.1']
  %s0 = inlined_call_operand.<no memory space> [shape: f32[1,1], index: 0, kind: input, shape index: {}]
  %s1 = inlined_call_operand.hbm [shape: f32[4,512], index: 1, kind: input, shape index: {}]
  %s2 = inlined_call_operand.hbm [shape: f32[4,512], index: 2, kind: output, shape index: {}]
  %s3 = sld [smem:[#allocation0]]
  $region22: #{tpu_custom_call.1} parent=0
    _
  %s5 = ssub.s32 1, %s3
  %s6 = scalar_select 0, %s5, %s3
  %7 = sst [smem:[#allocation2]] %s0
  $region1: #{tpu_custom_call.1} parent=0
    #allocation3 [shape = 'u8[8192]{0}', space=vmem, size = 0x2000, scoped, tag = 'input window, operand 1, single buffered']
    #allocation4 [shape = 's32[1]{0}', space=sflag, size = 0x4, scoped, tag = 'scoped memory for tpu_custom_call.1']
    #allocation5 [shape = 's32[1]{0}', space=sflag, size = 0x4, scoped, tag = 'scoped memory for tpu_custom_call.1']
    #allocation6 [shape = 'u8[8192]{0}', space=vmem, size = 0x2000, scoped, tag = 'output window, operand 0, single buffered']
    %8 = vsyncpa [#allocation4], 0
    %9 = vsyncpa [#allocation5], 0
    // Predicated region
    $region2: #{tpu_custom_call.1} parent=1 // pred_check
      _
    $region3: #{tpu_custom_call.1} parent=1 // pred_check_branch
      %11 = sbr.rel (0) target = $region5
    $region4: #{tpu_custom_call.1} parent=1 // pred_region
      _
    $region5: #{tpu_custom_call.1} parent=1 // pred_fallthru
      _
    // Predicated region
    $region6: #{tpu_custom_call.1} parent=1 // pred_check
      _
    $region7: #{tpu_custom_call.1} parent=1 // pred_check_branch
      %13 = sbr.rel (0) target = $region9
    $region8: #{tpu_custom_call.1} parent=1 // pred_region
      %15 = vsyncadd [#allocation4], 0
      %s17 = sshll.u32 %s1, 4
      %s18 = int_to_ptr.hbm [resolvable:$true] %s17
      %s19 = sshll.u32 [#allocation3], 4
      %s20 = int_to_ptr.vmem [resolvable:$true] %s19
      %22 = dma.hbm_to_vmem [thread:$0]  %s18, 256, %s20, [#allocation4]
    $region9: #{tpu_custom_call.1} parent=1 // pred_fallthru
      _
    // Predicated region
    $region10: #{tpu_custom_call.1} parent=1 // pred_check
      _
    $region11: #{tpu_custom_call.1} parent=1 // pred_check_branch
      %24 = sbr.rel (0) target = $region13
    $region12: #{tpu_custom_call.1} parent=1 // pred_region
      %26 = dma.done [#allocation4], 256
    $region13: #{tpu_custom_call.1} parent=1 // pred_fallthru
      _
    %s27 = sld [smem:[#allocation2]]
    %v28 = vld [vmem:[#allocation3] sm:$0xff]
    %v29 = vld [vmem:[#allocation3 + $0x8] sm:$0xff]
    %v30 = vstv %s27
    %v31 = vadd.f32 %v28, %v30
    %v32 = vadd.f32 %v29, %v30
    %33 = vst [vmem:[#allocation6] sm:$0xff] %v31
    %34 = vst [vmem:[#allocation6 + $0x8] sm:$0xff] %v32
    // Predicated region
    $region14: #{tpu_custom_call.1} parent=1 // pred_check
      _
    $region15: #{tpu_custom_call.1} parent=1 // pred_check_branch
      %36 = sbr.rel (0) target = $region17
    $region16: #{tpu_custom_call.1} parent=1 // pred_region
      %38 = vsyncadd [#allocation5], 0
      %s40 = sshll.u32 [#allocation6], 4
      %s41 = int_to_ptr.vmem [resolvable:$true] %s40
      %s42 = sshll.u32 %s2, 4
      %s43 = int_to_ptr.hbm [resolvable:$true] %s42
      %45 = dma.vmem_to_hbm [thread:$0]  %s41, 256, %s43, [#allocation5]
    $region17: #{tpu_custom_call.1} parent=1 // pred_fallthru
      _
    // Predicated region
    $region18: #{tpu_custom_call.1} parent=1 // pred_check
      _
    $region19: #{tpu_custom_call.1} parent=1 // pred_check_branch
      %47 = sbr.rel (0) target = $region21
    $region20: #{tpu_custom_call.1} parent=1 // pred_region
      %49 = dma.done [#allocation5], 256
    $region21: #{tpu_custom_call.1} parent=1 // pred_fallthru
      _
    %50 = vsyncpa [#allocation4], 1
    %51 = vsyncpa [#allocation5], 1

</llo_original>
